<compile_context>
chip_gen: v6e
topology: v6e:2x2x1
jax: 0.10.0
libtpu: 0.0.40
codegen_flags: <defaults>
</compile_context>

<pallas_src>
import jax
import jax.numpy as jnp
from jax.experimental import pallas as pl
from jax.experimental.pallas import tpu as pltpu

_M, _K, _N = 3, 3, 2  # x: (M, K), weight: (N, K), bias: (N,)


def fused_linear_stack_kernel(packed_ref, o_ref):
    # packed_ref: (8, 3) VMEM slab (single input DMA)
    #   rows 0..2 : x          (3, 3)
    #   rows 3..5 : weight^T   (3, 2) in (K, N) layout, col 2 is zero padding
    #   row  6    : bias       (1, 2), col 2 is zero padding
    #   row  7    : zero padding
    # o_ref: (6, 2)  rows 0-2 = y, rows 3-5 = y; row-major flatten of this
    #                block equals flatten(stack((y, y), 0)).
    x = packed_ref[0:3, 0:3]   # (3, 3)
    w = packed_ref[3:6, 0:2]   # (3, 2)  == weight.T, canonical (K, N)
    b = packed_ref[6:7, 0:2]   # (1, 2)

    # Unrolled VPU contraction: 3 broadcast muls + 3 adds, all in one vreg.
    # No MXU, no XLU transpose.
    y = (x[:, 0:1] * w[0:1, :]
         + x[:, 1:2] * w[1:2, :]
         + x[:, 2:3] * w[2:3, :]
         + b)                                  # (3, 2) f32

    # Duplicate in-register and issue a SINGLE store to the output tile.
    o_ref[...] = jnp.concatenate([y, y], axis=0).astype(o_ref.dtype)


def _pack_inputs(x, weight, bias):
    # Pack x (3,3), weight^T (3,2) and bias (2,) into one (8, 3) slab so the
    # pipeline issues one DMA instead of three.  Pad row/col count is tiny and
    # everything pads to a single (8,128) VMEM tile anyway.
    wt = weight.T                                            # (K, N) = (3, 2)
    wt_p = jnp.pad(wt, ((0, 0), (0, _K - _N)))               # (3, 3)
    b_p = jnp.pad(bias.reshape(1, _N), ((0, 0), (0, _K - _N)))  # (1, 3)
    pad_row = jnp.zeros((1, _K), x.dtype)                    # (1, 3)
    return jnp.concatenate([x, wt_p, b_p, pad_row], axis=0)  # (8, 3)


def _fused_forward_pallas(packed):
    flops = 2 * _M * _K * _N
    bytes_accessed = 4 * (packed.size + 2 * _M * _N)
    return pl.pallas_call(
        fused_linear_stack_kernel,
        out_shape=jax.ShapeDtypeStruct((2 * _M, _N), packed.dtype),
        in_specs=[pl.BlockSpec(memory_space=pltpu.MemorySpace.VMEM)],
        out_specs=pl.BlockSpec(memory_space=pltpu.MemorySpace.VMEM),
        cost_estimate=pl.CostEstimate(
            flops=flops, transcendentals=0, bytes_accessed=bytes_accessed
        ),
    )(packed)


@jax.jit
def model_forward(x, weight, bias):
    # nn.Linear(3, 2) -> torch.stack((y, y), 0) -> torch.flatten(., 0)
    packed = _pack_inputs(x, weight, bias)       # one fused XLA op, one DMA
    out2d = _fused_forward_pallas(packed)        # (6, 2)
    return out2d.reshape(-1)                     # (12,), free under jit


if __name__ == "__main__":
    key = jax.random.PRNGKey(0)
    kx, kw, kb = jax.random.split(key, 3)

    # Deterministic inputs / params (module shapes: Linear(3, 2), x = (3, 3))
    x = jax.random.normal(kx, (_M, _K), dtype=jnp.float32)
    weight = jax.random.normal(kw, (_N, _K), dtype=jnp.float32) * 0.1  # (out, in)
    bias = jax.random.normal(kb, (_N,), dtype=jnp.float32) * 0.1

    out = model_forward(x, weight, bias)
    jax.block_until_ready(out)

    # Sanity check against plain-JAX reference
    ref = jnp.concatenate([(x @ weight.T + bias).reshape(-1)] * 2, axis=0)
    assert out.shape == (2 * _M * _N,)
    assert jnp.allclose(out, ref, atol=1e-5), "mismatch vs reference"
    print("KERNEL_OK")
</pallas_src>

<mosaic_0001>
module attributes {stable_mosaic.version = 11 : i64} {
  func.func @fused_linear_stack_kernel(%arg0: memref<8x3xf32, #tpu.memory_space<vmem>>, %arg1: memref<6x2xf32, #tpu.memory_space<vmem>>) attributes {dimension_semantics = [], scalar_prefetch = 0 : i64, scratch_operands = 0 : i64, tpu.core_type = #tpu.core_type<tc>} {
    %c0 = arith.constant 0 : index
    %c0_0 = arith.constant 0 : index
    %0 = vector.load %arg0[%c0, %c0_0] : memref<8x3xf32, #tpu.memory_space<vmem>>, vector<3x3xf32>
    %c3 = arith.constant 3 : index
    %c0_1 = arith.constant 0 : index
    %1 = vector.load %arg0[%c3, %c0_1] : memref<8x3xf32, #tpu.memory_space<vmem>>, vector<3x2xf32>
    %c6 = arith.constant 6 : index
    %c0_2 = arith.constant 0 : index
    %2 = vector.load %arg0[%c6, %c0_2] : memref<8x3xf32, #tpu.memory_space<vmem>>, vector<1x2xf32>
    %3 = vector.extract_strided_slice %0 {offsets = [0, 0], sizes = [3, 1], strides = [1, 1]} : vector<3x3xf32> to vector<3x1xf32>
    %4 = vector.extract_strided_slice %1 {offsets = [0, 0], sizes = [1, 2], strides = [1, 1]} : vector<3x2xf32> to vector<1x2xf32>
    %5 = vector.broadcast %3 : vector<3x1xf32> to vector<3x2xf32>
    %6 = vector.broadcast %4 : vector<1x2xf32> to vector<3x2xf32>
    %7 = arith.mulf %5, %6 : vector<3x2xf32>
    %8 = vector.extract_strided_slice %0 {offsets = [0, 1], sizes = [3, 1], strides = [1, 1]} : vector<3x3xf32> to vector<3x1xf32>
    %9 = vector.extract_strided_slice %1 {offsets = [1, 0], sizes = [1, 2], strides = [1, 1]} : vector<3x2xf32> to vector<1x2xf32>
    %10 = vector.broadcast %8 : vector<3x1xf32> to vector<3x2xf32>
    %11 = vector.broadcast %9 : vector<1x2xf32> to vector<3x2xf32>
    %12 = arith.mulf %10, %11 : vector<3x2xf32>
    %13 = arith.addf %7, %12 : vector<3x2xf32>
    %14 = vector.extract_strided_slice %0 {offsets = [0, 2], sizes = [3, 1], strides = [1, 1]} : vector<3x3xf32> to vector<3x1xf32>
    %15 = vector.extract_strided_slice %1 {offsets = [2, 0], sizes = [1, 2], strides = [1, 1]} : vector<3x2xf32> to vector<1x2xf32>
    %16 = vector.broadcast %14 : vector<3x1xf32> to vector<3x2xf32>
    %17 = vector.broadcast %15 : vector<1x2xf32> to vector<3x2xf32>
    %18 = arith.mulf %16, %17 : vector<3x2xf32>
    %19 = arith.addf %13, %18 : vector<3x2xf32>
    %20 = vector.broadcast %2 : vector<1x2xf32> to vector<3x2xf32>
    %21 = arith.addf %19, %20 : vector<3x2xf32>
    %22 = tpu.concatenate %21, %21 in 0 : vector<3x2xf32>, vector<3x2xf32> -> vector<6x2xf32>
    %c0_3 = arith.constant 0 : index
    %c0_4 = arith.constant 0 : index
    %23 = vector.load %arg1[%c0_3, %c0_4] : memref<6x2xf32, #tpu.memory_space<vmem>>, vector<6x2xf32>
    tpu.vector_store %arg1[%c0_3, %c0_4], %22 {strides = array<i32>} : memref<6x2xf32, #tpu.memory_space<vmem>>, vector<6x2xf32>,
    return
  }
}

</mosaic_0001>

<llo_original>
// kernel: model_forward.1
$region0: #{model_forward.1}
  #allocation0 [shape = 'u32[]', space=smem, size = 0x4, offset = 0x4, fixed_abs, tag = 'smem constant byte address 0x4 - core index']
  #allocation1 [shape = 'u32[144,128]{1,0:T(1,128)}', space=vmem, size = 0x12000, scoped, tag = 'internal scratch']
  %s0 = inlined_call_operand.vmem [shape: f32[8,3], index: 0, kind: input, shape index: {}]
  %s1 = inlined_call_operand.vmem [shape: f32[6,2], index: 1, kind: output, shape index: {}]
  %s2 = sld [smem:[#allocation0]]
  $region14: #{model_forward.1} parent=0
    _
  %s4 = ssub.s32 1, %s2
  %s5 = scalar_select 0, %s4, %s2
  // Predicated region
  $region2: #{model_forward.1} parent=0 // pred_check
    _
  $region3: #{model_forward.1} parent=0 // pred_check_branch
    %7 = sbr.rel (0) target = $region5
  $region4: #{model_forward.1} parent=0 // pred_region
    _
  $region5: #{model_forward.1} parent=0 // pred_fallthru
    _
  %v8 = vld [vmem:[%s0] sm:$0x7]
  %v9 = vld [vmem:[%s0 + $0x3] sm:$0x7]
  %v10 = vld [vmem:[%s0 + $0x6] sm:$0x1]
  %12 = vset.pattern.permute.xlu0 0
  %13 = vperm.xlu0 %12, %v8
  %v14 = vpop.permute.xlu0 %13
  %v16 = vlaneseq
  %v17 = vshrl.u32 %v16, 7
  %v18 = vsub.s32 0, %v17
  %v19 = vrot.slane %v9, %v18
  %v20 = vmul.f32 %v14, %v19
  %21 = vset.pattern.permute.xlu0 1
  %22 = vperm.xlu0 %21, %v8
  %v23 = vpop.permute.xlu0 %22
  %v25 = vlaneseq
  %v26 = vshrl.u32 %v25, 7
  %v27 = vsub.s32 1, %v26
  %v28 = vrot.slane %v9, %v27
  %v29 = vmul.f32 %v23, %v28
  %v30 = vadd.f32 %v20, %v29
  %31 = vset.pattern.permute.xlu0 2
  %32 = vperm.xlu0 %31, %v8
  %v33 = vpop.permute.xlu0 %32
  %v35 = vlaneseq
  %v36 = vshrl.u32 %v35, 7
  %v37 = vsub.s32 2, %v36
  %v38 = vrot.slane %v9, %v37
  %v39 = vmul.f32 %v33, %v38
  %v40 = vadd.f32 %v30, %v39
  %v41 = vlaneseq
  %v42 = vshrl.u32 %v41, 7
  %v43 = vsub.s32 0, %v42
  %v44 = vrot.slane %v10, %v43
  %v45 = vadd.f32 %v40, %v44
  %v47 = vrot.slane %v45, 5
  %vm49 = vcmask 1042432
  %v50 = vsel %vm49, %v45, %v47
  %vm51 = vcmask 13312
  %52 = vst.msk [vmem:[%s1] sm:$0x3f] %vm51, %v50
  // Predicated region
  $region6: #{model_forward.1} parent=0 // pred_check
    _
  $region7: #{model_forward.1} parent=0 // pred_check_branch
    %54 = sbr.rel (0) target = $region9
  $region8: #{model_forward.1} parent=0 // pred_region
    _
  $region9: #{model_forward.1} parent=0 // pred_fallthru
    _
  // Predicated region
  $region10: #{model_forward.1} parent=0 // pred_check
    _
  $region11: #{model_forward.1} parent=0 // pred_check_branch
    %56 = sbr.rel (0) target = $region13
  $region12: #{model_forward.1} parent=0 // pred_region
    _
  $region13: #{model_forward.1} parent=0 // pred_fallthru
    _

</llo_original>
